<compile_context>
chip_gen: v5e
topology: v5e:2x2
jax: 0.10.0
libtpu: 0.0.40
codegen_flags: <defaults>
</compile_context>

<pallas_src>
import jax
import jax.numpy as jnp
from jax import lax
from jax.experimental import pallas as pl
from jax.experimental.pallas import tpu as pltpu

# ---- synthetic "args" (small, deterministic) --------------------------------
TOKEN_DIM = 4
ALLY_NUM = 3
ENEMY_NUM = 2
EMB = 32
ACTION_SPACE_SIZE = 6
BATCH = 2

N_ENT = ALLY_NUM + ENEMY_NUM                    # entities per agent observation
OBS_SIZE = TOKEN_DIM * N_ENT                    # args.token_dim * (ally_num + enemy_num)
N_OUT = ACTION_SPACE_SIZE + ENEMY_NUM           # checkpoint_path == '' branch
B_TOTAL = BATCH * ALLY_NUM                      # inputs.size(0)

SCALE = 1.0 / float(EMB) ** 0.5

# packed weight slab (all EMB-row matrices, concatenated on the lane axis):
#   [ w_kv (2*EMB) | w_q_enc (EMB) | w_q_dec (EMB) | w_act (N_OUT) ]
_OFF_KV = 0
_OFF_QE = 2 * EMB
_OFF_QD = 3 * EMB
_OFF_ACT = 4 * EMB
W_SLAB_W = 4 * EMB + N_OUT

# packed bias/query slab (single sublane row):
#   [ hidden_query (EMB) | action_query (EMB) | b_tok (EMB) | b_act (N_OUT) ]
_OFF_HQ = 0
_OFF_AQ = EMB
_OFF_BTOK = 2 * EMB
_OFF_BACT = 3 * EMB
VEC_W = 3 * EMB + N_OUT


# ---- fused Pallas kernel -----------------------------------------------------
def perceiver_agent_kernel(
    x_ref,       # (block_b * n_ent, token_dim) f32   entity tokens (flat)
    h_ref,       # (block_b, emb)               f32   previous hidden state
    wtok_ref,    # (token_dim, emb)             f32   token embedding weight
    wslab_ref,   # (emb, W_SLAB_W)              f32   [w_kv | w_q_enc | w_q_dec | w_act]
    vec_ref,     # (1, VEC_W)                   f32   [hidden_q | action_q | b_tok | b_act]
    q_out_ref,   # (block_b, n_out)
    h_out_ref,   # (block_b, emb)
):
    n = h_ref.shape[0]
    nk = n * N_ENT

    # static slab slices
    w_kv = wslab_ref[:, _OFF_KV:_OFF_KV + 2 * EMB]
    w_qe = wslab_ref[:, _OFF_QE:_OFF_QE + EMB]
    w_qd = wslab_ref[:, _OFF_QD:_OFF_QD + EMB]
    w_act = wslab_ref[:, _OFF_ACT:_OFF_ACT + N_OUT]

    hq = vec_ref[:, _OFF_HQ:_OFF_HQ + EMB]
    aq = vec_ref[:, _OFF_AQ:_OFF_AQ + EMB]
    b_tok = vec_ref[:, _OFF_BTOK:_OFF_BTOK + EMB]
    b_act = vec_ref[:, _OFF_BACT:_OFF_BACT + N_OUT]

    # --- token embedding (MXU): (nk, token_dim) @ (token_dim, emb) ------------
    te = jnp.dot(x_ref[...], wtok_ref[...],
                 preferred_element_type=jnp.float32) + b_tok           # (nk, emb)

    # fused K/V projection: one (emb -> 2*emb) matmul, then static lane slices
    kv = jnp.dot(te, w_kv, preferred_element_type=jnp.float32)         # (nk, 2*emb)
    k_flat = kv[:, :EMB]                                               # (nk, emb)
    v_flat = kv[:, EMB:]                                               # (nk, emb)

    # block-diagonal mask: query row i attends only to its own N_ENT tokens
    row = lax.broadcasted_iota(jnp.int32, (n, nk), 0)
    col = lax.broadcasted_iota(jnp.int32, (n, nk), 1)
    start = row * N_ENT
    own = (col >= start) & (col < start + N_ENT)                       # (n, nk) bool

    neg = jnp.float32(-1e30)
    scale = jnp.float32(SCALE)

    def cross_attend(q):
        # scores on the MXU: (n, emb) x (nk, emb) contracted over emb -> (n, nk)
        s = lax.dot_general(q, k_flat, (((1,), (1,)), ((), ())),
                            preferred_element_type=jnp.float32) * scale
        s = jnp.where(own, s, neg)
        s = s - jnp.max(s, axis=-1, keepdims=True)
        p = jnp.where(own, jnp.exp(s), jnp.float32(0.0))
        inv = pl.reciprocal(jnp.sum(p, axis=-1, keepdims=True), approx=True)
        p = p * inv
        # context on the MXU: (n, nk) @ (nk, emb)
        return jnp.dot(p, v_flat, preferred_element_type=jnp.float32)

    # --- encoder: (hidden_query + hidden_state) cross-attends over tokens -----
    q_enc = jnp.dot(h_ref[...] + hq, w_qe, preferred_element_type=jnp.float32)
    h_new = cross_attend(q_enc)                                        # (n, emb)

    # --- decoder: (action_query + new hidden) cross-attends over tokens -------
    q_dec = jnp.dot(h_new + aq, w_qd, preferred_element_type=jnp.float32)
    outputs = cross_attend(q_dec)                                      # (n, emb)

    # --- action_embedding ------------------------------------------------------
    q_out_ref[...] = jnp.dot(outputs, w_act,
                             preferred_element_type=jnp.float32) + b_act
    h_out_ref[...] = h_new


def _pick_block_rows(b):
    """Row-block size: multiple of 8 when possible, capped so blocks stay small."""
    for cand in (512, 256, 128, 64, 32, 16, 8):
        if b % cand == 0:
            return cand
    return b  # tiny / odd batches: single block covering the full array


@jax.jit
def multi_agent_perceiver_agent(inputs, hidden_state, params):
    """Mirrors MultiAgentPerceiverAgent.forward.

    inputs:       (b, obs_size)  with b = batch * ally_num
    hidden_state: (b, emb)
    returns (q, hidden) with q: (b, n_out, 1), hidden: (b, emb)
    """
    b = inputs.shape[0]
    # torch does inputs.view(-1, ally_num, obs_size); per-agent tokenization is the
    # same flat view, so reshape in the wrapper (free) -> kernel sees (b*n_ent, token_dim).
    x_flat = inputs.reshape(b * N_ENT, TOKEN_DIM).astype(jnp.float32)
    h = hidden_state.astype(jnp.float32)

    # pack the small parameters into two lane-wide slabs (fewer, denser DMAs)
    w_slab = jnp.concatenate(
        [params["w_k"], params["w_v"], params["w_q_enc"], params["w_q_dec"],
         params["w_act"]], axis=1).astype(jnp.float32)                  # (EMB, W_SLAB_W)
    vec_slab = jnp.concatenate(
        [params["hidden_query"], params["action_query"], params["b_tok"],
         params["b_act"]], axis=1).astype(jnp.float32)                  # (1, VEC_W)
    w_tok = params["w_tok"].astype(jnp.float32)

    block_b = _pick_block_rows(b)
    grid = (b // block_b,)

    grid_spec = pltpu.PrefetchScalarGridSpec(
        num_scalar_prefetch=0,
        grid=grid,
        in_specs=[
            pl.BlockSpec((block_b * N_ENT, TOKEN_DIM), lambda i: (i, 0)),
            pl.BlockSpec((block_b, EMB), lambda i: (i, 0)),
            pl.BlockSpec((TOKEN_DIM, EMB), lambda i: (0, 0)),
            pl.BlockSpec((EMB, W_SLAB_W), lambda i: (0, 0)),
            pl.BlockSpec((1, VEC_W), lambda i: (0, 0)),
        ],
        out_specs=[
            pl.BlockSpec((block_b, N_OUT), lambda i: (i, 0)),
            pl.BlockSpec((block_b, EMB), lambda i: (i, 0)),
        ],
    )

    q2d, h_new = pl.pallas_call(
        perceiver_agent_kernel,
        grid_spec=grid_spec,
        out_shape=[
            jax.ShapeDtypeStruct((b, N_OUT), jnp.float32),
            jax.ShapeDtypeStruct((b, EMB), jnp.float32),
        ],
        # hidden_state input (arg 1) reuses the hidden output buffer (output 1)
        input_output_aliases={1: 1},
        compiler_params=pltpu.CompilerParams(
            dimension_semantics=("parallel",)),
    )(x_flat, h, w_tok, w_slab, vec_slab)

    # q = action_embedding(outputs.view(-1, emb)).view(b, -1, 1)
    q = q2d.reshape(b, -1, 1)
    return q, h_new


# ---- pure-JAX reference (same stand-in math, unmasked per-row attention) ----
def _reference(inputs, hidden_state, params):
    b = inputs.shape[0]
    x = inputs.reshape(b, N_ENT, TOKEN_DIM)
    te = x @ params["w_tok"] + params["b_tok"]                    # (b, n_ent, emb)
    k = te @ params["w_k"]
    v = te @ params["w_v"]

    def attend(q):
        s = jnp.einsum("be,bne->bn", q, k) * SCALE
        p = jax.nn.softmax(s, axis=-1)
        return jnp.einsum("bn,bne->be", p, v)

    q_enc = (hidden_state + params["hidden_query"]) @ params["w_q_enc"]
    h_new = attend(q_enc)
    q_dec = (h_new + params["action_query"]) @ params["w_q_dec"]
    outputs = attend(q_dec)
    q = (outputs @ params["w_act"] + params["b_act"]).reshape(b, -1, 1)
    return q, h_new


def make_params(key):
    ks = jax.random.split(key, 10)
    u = lambda k, shape, lo=-0.1, hi=0.1: jax.random.uniform(
        k, shape, dtype=jnp.float32, minval=lo, maxval=hi)
    return {
        # nn.Parameter(torch.rand(1, emb)) -> uniform [0, 1)
        "action_query": jax.random.uniform(ks[0], (1, EMB), dtype=jnp.float32),
        "hidden_query": jax.random.uniform(ks[1], (1, EMB), dtype=jnp.float32),
        # perceiver stand-in weights
        "w_tok": u(ks[2], (TOKEN_DIM, EMB)),
        "b_tok": u(ks[3], (1, EMB)),
        "w_q_enc": u(ks[4], (EMB, EMB)),
        "w_q_dec": u(ks[5], (EMB, EMB)),
        "w_k": u(ks[6], (EMB, EMB)),
        "w_v": u(ks[7], (EMB, EMB)),
        # action_embedding: Linear(emb, action_space_size + enemy_num)
        "w_act": u(ks[8], (EMB, N_OUT)),
        "b_act": u(ks[9], (1, N_OUT)),
    }


if __name__ == "__main__":
    key = jax.random.PRNGKey(0)
    k_in, k_par = jax.random.split(key)

    # inputs: (batch * ally_num, obs_size); hidden: init_hidden() expanded.
    inputs = jax.random.normal(k_in, (B_TOTAL, OBS_SIZE), dtype=jnp.float32)
    hidden_state = jnp.zeros((B_TOTAL, EMB), dtype=jnp.float32)
    params = make_params(k_par)

    q, hidden = multi_agent_perceiver_agent(inputs, hidden_state, params)
    jax.block_until_ready((q, hidden))

    assert q.shape == (B_TOTAL, N_OUT, 1), q.shape
    assert hidden.shape == (B_TOTAL, EMB), hidden.shape
    assert bool(jnp.all(jnp.isfinite(q))) and bool(jnp.all(jnp.isfinite(hidden)))

    # numeric sanity vs. the unfused pure-JAX reference (approx reciprocal -> loose tol)
    q_ref, h_ref = _reference(inputs, hidden_state, params)
    assert bool(jnp.allclose(q, q_ref, atol=1e-2, rtol=1e-2)), "q mismatch"
    assert bool(jnp.allclose(hidden, h_ref, atol=1e-2, rtol=1e-2)), "hidden mismatch"

    print("KERNEL_OK")
</pallas_src>

<mosaic_0001>
module attributes {stable_mosaic.version = 11 : i64} {
  func.func @perceiver_agent_kernel(%arg0: i32, %arg1: memref<30x4xf32, #tpu.memory_space<vmem>>, %arg2: memref<6x32xf32, #tpu.memory_space<vmem>>, %arg3: memref<4x32xf32, #tpu.memory_space<vmem>>, %arg4: memref<32x136xf32, #tpu.memory_space<vmem>>, %arg5: memref<1x104xf32, #tpu.memory_space<vmem>>, %arg6: memref<6x8xf32, #tpu.memory_space<vmem>>, %arg7: memref<6x32xf32, #tpu.memory_space<vmem>>) attributes {dimension_semantics = [#tpu.dimension_semantics<parallel>], iteration_bounds = array<i64: 1>, scalar_prefetch = 0 : i64, scratch_operands = 0 : i64, tpu.core_type = #tpu.core_type<tc>, window_params = [{transform_indices = @transform_0, window_bounds = array<i64: 30, 4>}, {transform_indices = @transform_1, window_bounds = array<i64: 6, 32>}, {pipeline_mode = #tpu.pipeline_mode<synchronous>, transform_indices = @transform_2, window_bounds = array<i64: 4, 32>}, {pipeline_mode = #tpu.pipeline_mode<synchronous>, transform_indices = @transform_3, window_bounds = array<i64: 32, 136>}, {pipeline_mode = #tpu.pipeline_mode<synchronous>, transform_indices = @transform_4, window_bounds = array<i64: 1, 104>}, {transform_indices = @transform_5, window_bounds = array<i64: 6, 8>}, {transform_indices = @transform_6, window_bounds = array<i64: 6, 32>}]} {
    %c0 = arith.constant 0 : index
    %c0_0 = arith.constant 0 : index
    %0 = vector.load %arg4[%c0, %c0_0] : memref<32x136xf32, #tpu.memory_space<vmem>>, vector<32x64xf32>
    %c0_1 = arith.constant 0 : index
    %c64 = arith.constant 64 : index
    %1 = vector.load %arg4[%c0_1, %c64] : memref<32x136xf32, #tpu.memory_space<vmem>>, vector<32x32xf32>
    %c0_2 = arith.constant 0 : index
    %c96 = arith.constant 96 : index
    %2 = vector.load %arg4[%c0_2, %c96] : memref<32x136xf32, #tpu.memory_space<vmem>>, vector<32x32xf32>
    %c0_3 = arith.constant 0 : index
    %c128 = arith.constant 128 : index
    %3 = vector.load %arg4[%c0_3, %c128] : memref<32x136xf32, #tpu.memory_space<vmem>>, vector<32x8xf32>
    %c0_4 = arith.constant 0 : index
    %c0_5 = arith.constant 0 : index
    %4 = vector.load %arg5[%c0_4, %c0_5] : memref<1x104xf32, #tpu.memory_space<vmem>>, vector<1x32xf32>
    %c0_6 = arith.constant 0 : index
    %c32 = arith.constant 32 : index
    %5 = vector.load %arg5[%c0_6, %c32] : memref<1x104xf32, #tpu.memory_space<vmem>>, vector<1x32xf32>
    %c0_7 = arith.constant 0 : index
    %c64_8 = arith.constant 64 : index
    %6 = vector.load %arg5[%c0_7, %c64_8] : memref<1x104xf32, #tpu.memory_space<vmem>>, vector<1x32xf32>
    %c0_9 = arith.constant 0 : index
    %c96_10 = arith.constant 96 : index
    %7 = vector.load %arg5[%c0_9, %c96_10] : memref<1x104xf32, #tpu.memory_space<vmem>>, vector<1x8xf32>
    %c0_11 = arith.constant 0 : index
    %c0_12 = arith.constant 0 : index
    %8 = vector.load %arg1[%c0_11, %c0_12] : memref<30x4xf32, #tpu.memory_space<vmem>>, vector<30x4xf32>
    %c0_13 = arith.constant 0 : index
    %c0_14 = arith.constant 0 : index
    %9 = vector.load %arg3[%c0_13, %c0_14] : memref<4x32xf32, #tpu.memory_space<vmem>>, vector<4x32xf32>
    %cst = arith.constant dense<0.000000e+00> : vector<30x32xf32>
    %10 = tpu.matmul %8, %9, %cst {dimension_numbers = #tpu.dot_dimension_numbers<[1], [0], [0], [1], [0, 0, 1, 1], [], []>} : vector<30x4xf32>, vector<4x32xf32>, vector<30x32xf32> -> vector<30x32xf32>
    %11 = vector.broadcast %6 : vector<1x32xf32> to vector<30x32xf32>
    %12 = arith.addf %10, %11 : vector<30x32xf32>
    %cst_15 = arith.constant dense<0.000000e+00> : vector<30x64xf32>
    %13 = tpu.matmul %12, %0, %cst_15 {dimension_numbers = #tpu.dot_dimension_numbers<[1], [0], [0], [1], [0, 0, 1, 1], [], []>} : vector<30x32xf32>, vector<32x64xf32>, vector<30x64xf32> -> vector<30x64xf32>
    %14 = vector.extract_strided_slice %13 {offsets = [0, 0], sizes = [30, 32], strides = [1, 1]} : vector<30x64xf32> to vector<30x32xf32>
    %15 = vector.extract_strided_slice %13 {offsets = [0, 32], sizes = [30, 32], strides = [1, 1]} : vector<30x64xf32> to vector<30x32xf32>
    %16 = tpu.iota {dimensions = array<i32: 0>} : vector<6x30xi32>
    %17 = tpu.iota {dimensions = array<i32: 1>} : vector<6x30xi32>
    %c5_i32 = arith.constant 5 : i32
    %18 = vector.broadcast %c5_i32 : i32 to vector<6x30xi32>
    %19 = arith.muli %16, %18 : vector<6x30xi32>
    %20 = arith.cmpi sge, %17, %19 : vector<6x30xi32>
    %c5_i32_16 = arith.constant 5 : i32
    %21 = vector.broadcast %c5_i32_16 : i32 to vector<6x30xi32>
    %22 = arith.addi %19, %21 : vector<6x30xi32>
    %23 = arith.cmpi slt, %17, %22 : vector<6x30xi32>
    %24 = arith.andi %20, %23 : vector<6x30xi1>
    %c0_17 = arith.constant 0 : index
    %c0_18 = arith.constant 0 : index
    %25 = vector.load %arg2[%c0_17, %c0_18] : memref<6x32xf32, #tpu.memory_space<vmem>>, vector<6x32xf32>
    %26 = vector.broadcast %4 : vector<1x32xf32> to vector<6x32xf32>
    %27 = arith.addf %25, %26 : vector<6x32xf32>
    %cst_19 = arith.constant dense<0.000000e+00> : vector<6x32xf32>
    %28 = tpu.matmul %27, %1, %cst_19 {dimension_numbers = #tpu.dot_dimension_numbers<[1], [0], [0], [1], [0, 0, 1, 1], [], []>} : vector<6x32xf32>, vector<32x32xf32>, vector<6x32xf32> -> vector<6x32xf32>
    %cst_20 = arith.constant dense<0.000000e+00> : vector<6x30xf32>
    %29 = tpu.matmul %28, %14, %cst_20 {dimension_numbers = #tpu.dot_dimension_numbers<[1], [1], [0], [0], [0, 0, 1, 0], [], []>} : vector<6x32xf32>, vector<30x32xf32>, vector<6x30xf32> -> vector<6x30xf32>
    %cst_21 = arith.constant 0.176776692 : f32
    %30 = vector.broadcast %cst_21 : f32 to vector<6x30xf32>
    %31 = arith.mulf %29, %30 : vector<6x30xf32>
    %cst_22 = arith.constant -1.000000e+30 : f32
    %32 = vector.broadcast %cst_22 : f32 to vector<6x30xf32>
    %33 = arith.select %24, %31, %32 : vector<6x30xi1>, vector<6x30xf32>
    %cst_23 = arith.constant dense<0xFF800000> : vector<6xf32>
    %34 = vector.multi_reduction <maximumf>, %33, %cst_23 [1] : vector<6x30xf32> to vector<6xf32>
    %35 = vector.shape_cast %34 : vector<6xf32> to vector<6x1xf32>
    %36 = vector.broadcast %35 : vector<6x1xf32> to vector<6x30xf32>
    %37 = arith.subf %33, %36 : vector<6x30xf32>
    %38 = math.exp %37 : vector<6x30xf32>
    %cst_24 = arith.constant 0.000000e+00 : f32
    %39 = vector.broadcast %cst_24 : f32 to vector<6x30xf32>
    %40 = arith.select %24, %38, %39 : vector<6x30xi1>, vector<6x30xf32>
    %cst_25 = arith.constant dense<0.000000e+00> : vector<6xf32>
    %41 = vector.multi_reduction <add>, %40, %cst_25 [1] : vector<6x30xf32> to vector<6xf32>
    %42 = vector.shape_cast %41 : vector<6xf32> to vector<6x1xf32>
    %43 = tpu.reciprocal %42 {approx = true} : vector<6x1xf32> -> vector<6x1xf32>
    %44 = vector.broadcast %43 : vector<6x1xf32> to vector<6x30xf32>
    %45 = arith.mulf %40, %44 : vector<6x30xf32>
    %cst_26 = arith.constant dense<0.000000e+00> : vector<6x32xf32>
    %46 = tpu.matmul %45, %15, %cst_26 {dimension_numbers = #tpu.dot_dimension_numbers<[1], [0], [0], [1], [0, 0, 1, 1], [], []>} : vector<6x30xf32>, vector<30x32xf32>, vector<6x32xf32> -> vector<6x32xf32>
    %47 = vector.broadcast %5 : vector<1x32xf32> to vector<6x32xf32>
    %48 = arith.addf %46, %47 : vector<6x32xf32>
    %cst_27 = arith.constant dense<0.000000e+00> : vector<6x32xf32>
    %49 = tpu.matmul %48, %2, %cst_27 {dimension_numbers = #tpu.dot_dimension_numbers<[1], [0], [0], [1], [0, 0, 1, 1], [], []>} : vector<6x32xf32>, vector<32x32xf32>, vector<6x32xf32> -> vector<6x32xf32>
    %cst_28 = arith.constant dense<0.000000e+00> : vector<6x30xf32>
    %50 = tpu.matmul %49, %14, %cst_28 {dimension_numbers = #tpu.dot_dimension_numbers<[1], [1], [0], [0], [0, 0, 1, 0], [], []>} : vector<6x32xf32>, vector<30x32xf32>, vector<6x30xf32> -> vector<6x30xf32>
    %cst_29 = arith.constant 0.176776692 : f32
    %51 = vector.broadcast %cst_29 : f32 to vector<6x30xf32>
    %52 = arith.mulf %50, %51 : vector<6x30xf32>
    %cst_30 = arith.constant -1.000000e+30 : f32
    %53 = vector.broadcast %cst_30 : f32 to vector<6x30xf32>
    %54 = arith.select %24, %52, %53 : vector<6x30xi1>, vector<6x30xf32>
    %cst_31 = arith.constant dense<0xFF800000> : vector<6xf32>
    %55 = vector.multi_reduction <maximumf>, %54, %cst_31 [1] : vector<6x30xf32> to vector<6xf32>
    %56 = vector.shape_cast %55 : vector<6xf32> to vector<6x1xf32>
    %57 = vector.broadcast %56 : vector<6x1xf32> to vector<6x30xf32>
    %58 = arith.subf %54, %57 : vector<6x30xf32>
    %59 = math.exp %58 : vector<6x30xf32>
    %cst_32 = arith.constant 0.000000e+00 : f32
    %60 = vector.broadcast %cst_32 : f32 to vector<6x30xf32>
    %61 = arith.select %24, %59, %60 : vector<6x30xi1>, vector<6x30xf32>
    %cst_33 = arith.constant dense<0.000000e+00> : vector<6xf32>
    %62 = vector.multi_reduction <add>, %61, %cst_33 [1] : vector<6x30xf32> to vector<6xf32>
    %63 = vector.shape_cast %62 : vector<6xf32> to vector<6x1xf32>
    %64 = tpu.reciprocal %63 {approx = true} : vector<6x1xf32> -> vector<6x1xf32>
    %65 = vector.broadcast %64 : vector<6x1xf32> to vector<6x30xf32>
    %66 = arith.mulf %61, %65 : vector<6x30xf32>
    %cst_34 = arith.constant dense<0.000000e+00> : vector<6x32xf32>
    %67 = tpu.matmul %66, %15, %cst_34 {dimension_numbers = #tpu.dot_dimension_numbers<[1], [0], [0], [1], [0, 0, 1, 1], [], []>} : vector<6x30xf32>, vector<30x32xf32>, vector<6x32xf32> -> vector<6x32xf32>
    %cst_35 = arith.constant dense<0.000000e+00> : vector<6x8xf32>
    %68 = tpu.matmul %67, %3, %cst_35 {dimension_numbers = #tpu.dot_dimension_numbers<[1], [0], [0], [1], [0, 0, 1, 1], [], []>} : vector<6x32xf32>, vector<32x8xf32>, vector<6x8xf32> -> vector<6x8xf32>
    %69 = vector.broadcast %7 : vector<1x8xf32> to vector<6x8xf32>
    %70 = arith.addf %68, %69 : vector<6x8xf32>
    %c0_36 = arith.constant 0 : index
    %c0_37 = arith.constant 0 : index
    %71 = vector.load %arg6[%c0_36, %c0_37] : memref<6x8xf32, #tpu.memory_space<vmem>>, vector<6x8xf32>
    tpu.vector_store %arg6[%c0_36, %c0_37], %70 {strides = array<i32>} : memref<6x8xf32, #tpu.memory_space<vmem>>, vector<6x8xf32>,
    %c0_38 = arith.constant 0 : index
    %c0_39 = arith.constant 0 : index
    %72 = vector.load %arg7[%c0_38, %c0_39] : memref<6x32xf32, #tpu.memory_space<vmem>>, vector<6x32xf32>
    tpu.vector_store %arg7[%c0_38, %c0_39], %46 {strides = array<i32>} : memref<6x32xf32, #tpu.memory_space<vmem>>, vector<6x32xf32>,
    return
  }
  func.func @transform_0(%arg0: i32) -> (i32, i32) {
    %c0_i32 = arith.constant 0 : i32
    %c0_i32_0 = arith.constant 0 : i32
    return %arg0, %c0_i32 : i32, i32
  }
  func.func @transform_1(%arg0: i32) -> (i32, i32) {
    %c0_i32 = arith.constant 0 : i32
    %c0_i32_0 = arith.constant 0 : i32
    return %arg0, %c0_i32 : i32, i32
  }
  func.func @transform_2(%arg0: i32) -> (i32, i32) {
    %c0_i32 = arith.constant 0 : i32
    %c0_i32_0 = arith.constant 0 : i32
    %c0_i32_1 = arith.constant 0 : i32
    return %c0_i32, %c0_i32_0 : i32, i32
  }
  func.func @transform_3(%arg0: i32) -> (i32, i32) {
    %c0_i32 = arith.constant 0 : i32
    %c0_i32_0 = arith.constant 0 : i32
    %c0_i32_1 = arith.constant 0 : i32
    return %c0_i32, %c0_i32_0 : i32, i32
  }
  func.func @transform_4(%arg0: i32) -> (i32, i32) {
    %c0_i32 = arith.constant 0 : i32
    %c0_i32_0 = arith.constant 0 : i32
    %c0_i32_1 = arith.constant 0 : i32
    return %c0_i32, %c0_i32_0 : i32, i32
  }
  func.func @transform_5(%arg0: i32) -> (i32, i32) {
    %c0_i32 = arith.constant 0 : i32
    %c0_i32_0 = arith.constant 0 : i32
    return %arg0, %c0_i32 : i32, i32
  }
  func.func @transform_6(%arg0: i32) -> (i32, i32) {
    %c0_i32 = arith.constant 0 : i32
    %c0_i32_0 = arith.constant 0 : i32
    return %arg0, %c0_i32 : i32, i32
  }
}

</mosaic_0001>

<llo_original>
// kernel: multi_agent_perceiver_agent.1
$region0: #{multi_agent_perceiver_agent.1}
  #allocation0 [shape = 'u32[]', space=smem, size = 0x4, offset = 0x4, fixed_abs, tag = 'smem constant byte address 0x4 - core index']
  #allocation1 [shape = 'u32[72,128]{1,0:T(1,128)}', space=vmem, size = 0x9000, scoped, tag = 'internal scratch']
  %s0 = inlined_call_operand.vmem [shape: f32[30,4], index: 0, kind: input, shape index: {}]
  %s1 = inlined_call_operand.vmem [shape: f32[6,32], index: 1, kind: input, shape index: {}, may-alias: {1,6}]
  %s2 = inlined_call_operand.vmem [shape: f32[4,32], index: 2, kind: input, shape index: {}]
  %s3 = inlined_call_operand.vmem [shape: f32[32,136], index: 3, kind: input, shape index: {}]
  %s4 = inlined_call_operand.vmem [shape: f32[1,104], index: 4, kind: input, shape index: {}]
  %s5 = inlined_call_operand.vmem [shape: f32[6,8], index: 5, kind: output, shape index: {0}]
  %s6 = inlined_call_operand.vmem [shape: f32[6,32], index: 6, kind: output, shape index: {1}, may-alias: {1,6}]
  %7 = xla_tuple %s5, %s6
  %s8 = sld [smem:[#allocation0]]
  $region38: #{multi_agent_perceiver_agent.1} parent=0
    _
  %s10 = ssub.s32 1, %s8
  %s11 = scalar_select 0, %s10, %s8
  // Predicated region
  $region2: #{multi_agent_perceiver_agent.1} parent=0 // pred_check
    _
  $region3: #{multi_agent_perceiver_agent.1} parent=0 // pred_check_branch
    %13 = sbr.rel (0) target = $region5
  $region4: #{multi_agent_perceiver_agent.1} parent=0 // pred_region
    _
  $region5: #{multi_agent_perceiver_agent.1} parent=0 // pred_fallthru
    _
  // Predicated region
  $region6: #{multi_agent_perceiver_agent.1} parent=0 // pred_check
    _
  $region7: #{multi_agent_perceiver_agent.1} parent=0 // pred_check_branch
    %15 = sbr.rel (0) target = $region9
  $region8: #{multi_agent_perceiver_agent.1} parent=0 // pred_region
    _
  $region9: #{multi_agent_perceiver_agent.1} parent=0 // pred_fallthru
    _
  // Predicated region
  $region10: #{multi_agent_perceiver_agent.1} parent=0 // pred_check
    _
  $region11: #{multi_agent_perceiver_agent.1} parent=0 // pred_check_branch
    %17 = sbr.rel (0) target = $region13
  $region12: #{multi_agent_perceiver_agent.1} parent=0 // pred_region
    _
  $region13: #{multi_agent_perceiver_agent.1} parent=0 // pred_fallthru
    _
  // Predicated region
  $region14: #{multi_agent_perceiver_agent.1} parent=0 // pred_check
    _
  $region15: #{multi_agent_perceiver_agent.1} parent=0 // pred_check_branch
    %19 = sbr.rel (0) target = $region17
  $region16: #{multi_agent_perceiver_agent.1} parent=0 // pred_region
    _
  $region17: #{multi_agent_perceiver_agent.1} parent=0 // pred_fallthru
    _
  // Predicated region
  $region18: #{multi_agent_perceiver_agent.1} parent=0 // pred_check
    _
  $region19: #{multi_agent_perceiver_agent.1} parent=0 // pred_check_branch
    %21 = sbr.rel (0) target = $region21
  $region20: #{multi_agent_perceiver_agent.1} parent=0 // pred_region
    _
  $region21: #{multi_agent_perceiver_agent.1} parent=0 // pred_fallthru
    _
  %v22 = vld [vmem:[%s3] sm:$0xff]
  %v23 = vld [vmem:[%s3 + $0x10] sm:$0xff]
  %v24 = vld [vmem:[%s3 + $0x20] sm:$0xff]
  %v25 = vld [vmem:[%s3 + $0x30] sm:$0xff]
  %v26 = vld [vmem:[%s3 + $0x8] sm:$0xff]
  %v27 = vld [vmem:[%s3 + $0x18] sm:$0xff]
  %v28 = vld [vmem:[%s3 + $0x28] sm:$0xff]
  %v29 = vld [vmem:[%s3 + $0x38] sm:$0xff]
  %v30 = vld [vmem:[%s4] sm:$0x1]
  %v31 = vld [vmem:[%s0] sm:$0xff]
  %v32 = vld [vmem:[%s0 + $0x8] sm:$0xff]
  %v33 = vld [vmem:[%s0 + $0x10] sm:$0xff]
  %v34 = vld [vmem:[%s0 + $0x18] sm:$0x3f]
  %v35 = vld [vmem:[%s2] sm:$0xf]
  %v37 = vperm.slane %v30, 0
  %38 = vrot.lane.b32.xlu0 %v37, 64
  %v39 = vpop.permute.xlu0 %38
  %vm41 = vcmask 31744
  %v43 = vsel %vm41, %v31, 0
  %v46 = vsel %vm41, %v32, 0
  %v49 = vsel %vm41, %v33, 0
  %v52 = vsel %vm41, %v34, 0
  %vm54 = vcmask 1043456
  %v56 = vsel %vm54, %v35, 0
  %58 = vmatpush.msra.mxu0 0.0
  %59 = vmatpush.msra.mxu0 0.0
  %60 = vmatpush.msra.mxu0 0.0
  %61 = vmatpush.msra.mxu0 0.0
  %62 = vmatpush.msra.mxu0 0.0
  %63 = vmatpush.msra.mxu0 0.0
  %64 = vmatpush.msra.mxu0 0.0
  %65 = vmatpush.msra.mxu0 0.0
  %66 = vmatpush.msra.mxu0 0.0
  %67 = vmatpush.msra.mxu0 0.0
  %68 = vmatpush.msra.mxu0 0.0
  %69 = vmatpush.msra.mxu0 0.0
  %70 = vmatpush.msra.mxu0 0.0
  %71 = vmatpush.msra.mxu0 0.0
  %72 = vmatpush.msra.mxu0 0.0
  %73 = vmatpush.msra.mxu0 %v56
  %74 = vmatmul.f32.gmra.mxu0 %v43
  %v75 = vpop.f32.mrf.mxu0
  %v76 = vadd.f32 %v39, %v75
  %77 = vmatmul.f32.gmra.mxu0 %v46
  %v78 = vpop.f32.mrf.mxu0
  %v79 = vadd.f32 %v39, %v78
  %80 = vmatmul.f32.gmra.mxu0 %v49
  %v81 = vpop.f32.mrf.mxu0
  %v82 = vadd.f32 %v39, %v81
  %83 = vmatmul.f32.gmra.mxu0 %v52
  %v84 = vpop.f32.mrf.mxu0
  %v85 = vadd.f32 %v39, %v84
  %86 = vdwg.mxu0
  %vm87 = vcmask 261120
  %v89 = vsel %vm87, %v76, 0
  %v92 = vsel %vm87, %v79, 0
  %v95 = vsel %vm87, %v82, 0
  %v98 = vsel %vm87, %v85, 0
  %100 = vmatpush.msra.mxu0 0.0
  %101 = vmatpush.msra.mxu0 0.0
  %102 = vmatpush.msra.mxu0 0.0
  %103 = vmatpush.msra.mxu0 0.0
  %104 = vmatpush.msra.mxu0 0.0
  %105 = vmatpush.msra.mxu0 0.0
  %106 = vmatpush.msra.mxu0 0.0
  %107 = vmatpush.msra.mxu0 0.0
  %108 = vmatpush.msra.mxu0 0.0
  %109 = vmatpush.msra.mxu0 0.0
  %110 = vmatpush.msra.mxu0 0.0
  %111 = vmatpush.msra.mxu0 0.0
  %112 = vmatpush.msra.mxu0 %v25
  %113 = vmatpush.msra.mxu0 %v24
  %114 = vmatpush.msra.mxu0 %v23
  %115 = vmatpush.msra.mxu0 %v22
  %116 = vmatmul.f32.gmra.mxu0 %v89
  %v117 = vpop.f32.mrf.mxu0
  %v118 = vadd.f32 0.0, %v117
  %119 = vmatmul.f32.gmra.mxu0 %v92
  %v120 = vpop.f32.mrf.mxu0
  %v121 = vadd.f32 0.0, %v120
  %122 = vmatmul.f32.gmra.mxu0 %v95
  %v123 = vpop.f32.mrf.mxu0
  %v124 = vadd.f32 0.0, %v123
  %125 = vmatmul.f32.gmra.mxu0 %v98
  %v126 = vpop.f32.mrf.mxu0
  %v127 = vadd.f32 0.0, %v126
  %128 = vdwg.mxu0
  %v129 = vlaneseq
  %v130 = vshrl.u32 %v129, 7
  %v131 = vlaneseq
  %v132 = vand.u32 %v131, 127
  %v133 = vmul.u32 %v130, 5
  %vm134 = vcmp.ge.s32.totalorder %v132, %v133
  %v135 = vadd.s32 %v133, 5
  %vm136 = vcmp.lt.s32.totalorder %v132, %v135
  %vm137 = vmand %vm134, %vm136
  %v138 = vld [vmem:[%s1] sm:$0x3f]
  %v140 = vadd.f32 %v138, %v37
  %145 = vrot.lane.b32.xlu0 %v22, 64
  %v146 = vpop.permute.xlu0 %145
  %147 = vrot.lane.b32.xlu0 %v23, 64
  %v148 = vpop.permute.xlu0 %147
  %149 = vrot.lane.b32.xlu0 %v24, 64
  %v150 = vpop.permute.xlu0 %149
  %151 = vrot.lane.b32.xlu0 %v25, 64
  %v152 = vpop.permute.xlu0 %151
  %v158 = vsel %vm87, %v140, 0
  %160 = vmatpush.msra.mxu0 0.0
  %161 = vmatpush.msra.mxu0 0.0
  %162 = vmatpush.msra.mxu0 0.0
  %163 = vmatpush.msra.mxu0 0.0
  %164 = vmatpush.msra.mxu0 0.0
  %165 = vmatpush.msra.mxu0 0.0
  %166 = vmatpush.msra.mxu0 0.0
  %167 = vmatpush.msra.mxu0 0.0
  %168 = vmatpush.msra.mxu0 0.0
  %169 = vmatpush.msra.mxu0 0.0
  %170 = vmatpush.msra.mxu0 0.0
  %171 = vmatpush.msra.mxu0 0.0
  %172 = vmatpush.msra.mxu0 %v152
  %173 = vmatpush.msra.mxu0 %v150
  %174 = vmatpush.msra.mxu0 %v148
  %175 = vmatpush.msra.mxu0 %v146
  %176 = vmatmul.f32.gmra.mxu0 %v158
  %v177 = vpop.f32.mrf.mxu0
  %v178 = vadd.f32 0.0, %v177
  %179 = vdwg.mxu0
  %v181 = vsel %vm87, %v178, 0
  %v184 = vsel %vm87, %v118, 0
  %v187 = vsel %vm87, %v121, 0
  %v190 = vsel %vm87, %v124, 0
  %v193 = vsel %vm87, %v127, 0
  %195 = vmatpush.xpose.msra.mxu0 0.0
  %196 = vmatpush.xpose.msra.mxu0 0.0
  %197 = vmatpush.xpose.msra.mxu0 0.0
  %198 = vmatpush.xpose.msra.mxu0 0.0
  %199 = vmatpush.xpose.msra.mxu0 0.0
  %200 = vmatpush.xpose.msra.mxu0 0.0
  %201 = vmatpush.xpose.msra.mxu0 0.0
  %202 = vmatpush.xpose.msra.mxu0 0.0
  %203 = vmatpush.xpose.msra.mxu0 0.0
  %204 = vmatpush.xpose.msra.mxu0 0.0
  %205 = vmatpush.xpose.msra.mxu0 0.0
  %206 = vmatpush.xpose.msra.mxu0 0.0
  %207 = vmatpush.xpose.msra.mxu0 %v193
  %208 = vmatpush.xpose.msra.mxu0 %v190
  %209 = vmatpush.xpose.msra.mxu0 %v187
  %210 = vmatpush.xpose.msra.mxu0 %v184
  %211 = vmatmul.f32.gmra.mxu0 %v181
  %v212 = vpop.f32.mrf.mxu0
  %v213 = vadd.f32 0.0, %v212
  %214 = vdwg.mxu0
  %v215 = vmul.f32 %v213, 0.17677669
  %v216 = vsel %vm137, %v215, -1e+30
  %vm217 = vcmask 242688
  %v218 = vsel %vm217, %v216, -inf
  %219 = vmax.xlane.f32.xlu0 %v218
  %v220 = vpop.xlane.xlu0 %219
  %v221 = vsub.f32 %v216, %v220
  %v222 = vmul.f32 %v221, 1.442695
  %v223 = vpow.pop %v222
  %v224 = vsel %vm137, %v223, 0.0
  %v225 = vsel %vm217, %v224, 0.0
  %226 = vadd.xlane.f32.xlu0 %v225
  %v227 = vpop.xlane.xlu0 %226
  %v228 = vrcp.pop %v227
  %v229 = vmul.f32 %v224, %v228
  %230 = vrot.lane.b32.xlu0 %v118, 96
  %v231 = vpop.permute.xlu0 %230
  %232 = vrot.lane.b32.xlu0 %v121, 96
  %v233 = vpop.permute.xlu0 %232
  %234 = vrot.lane.b32.xlu0 %v124, 96
  %v235 = vpop.permute.xlu0 %234
  %236 = vrot.lane.b32.xlu0 %v127, 96
  %v237 = vpop.permute.xlu0 %236
  %vm241 = vcmask 244736
  %v243 = vsel %vm241, %v229, 0
  %vm245 = vcmask 1045504
  %v246 = vsel %vm245, %v237, 0
  %248 = vmatpush.msra.mxu0 0.0
  %249 = vmatpush.msra.mxu0 0.0
  %250 = vmatpush.msra.mxu0 0.0
  %251 = vmatpush.msra.mxu0 0.0
  %252 = vmatpush.msra.mxu0 0.0
  %253 = vmatpush.msra.mxu0 0.0
  %254 = vmatpush.msra.mxu0 0.0
  %255 = vmatpush.msra.mxu0 0.0
  %256 = vmatpush.msra.mxu0 0.0
  %257 = vmatpush.msra.mxu0 0.0
  %258 = vmatpush.msra.mxu0 0.0
  %259 = vmatpush.msra.mxu0 0.0
  %260 = vmatpush.msra.mxu0 %v246
  %261 = vmatpush.msra.mxu0 %v235
  %262 = vmatpush.msra.mxu0 %v233
  %263 = vmatpush.msra.mxu0 %v231
  %264 = vmatmul.f32.gmra.mxu0 %v243
  %v265 = vpop.f32.mrf.mxu0
  %v266 = vadd.f32 0.0, %v265
  %267 = vdwg.mxu0
  %268 = vrot.lane.b32.xlu0 %v37, 96
  %v269 = vpop.permute.xlu0 %268
  %v271 = vadd.f32 %v266, %v269
  %272 = vrot.lane.b32.xlu0 %v22, 32
  %v273 = vpop.permute.xlu0 %272
  %274 = vrot.lane.b32.xlu0 %v23, 32
  %v275 = vpop.permute.xlu0 %274
  %276 = vrot.lane.b32.xlu0 %v24, 32
  %v277 = vpop.permute.xlu0 %276
  %278 = vrot.lane.b32.xlu0 %v25, 32
  %v279 = vpop.permute.xlu0 %278
  %v285 = vsel %vm87, %v271, 0
  %287 = vmatpush.msra.mxu0 0.0
  %288 = vmatpush.msra.mxu0 0.0
  %289 = vmatpush.msra.mxu0 0.0
  %290 = vmatpush.msra.mxu0 0.0
  %291 = vmatpush.msra.mxu0 0.0
  %292 = vmatpush.msra.mxu0 0.0
  %293 = vmatpush.msra.mxu0 0.0
  %294 = vmatpush.msra.mxu0 0.0
  %295 = vmatpush.msra.mxu0 0.0
  %296 = vmatpush.msra.mxu0 0.0
  %297 = vmatpush.msra.mxu0 0.0
  %298 = vmatpush.msra.mxu0 0.0
  %299 = vmatpush.msra.mxu0 %v279
  %300 = vmatpush.msra.mxu0 %v277
  %301 = vmatpush.msra.mxu0 %v275
  %302 = vmatpush.msra.mxu0 %v273
  %303 = vmatmul.f32.gmra.mxu0 %v285
  %v304 = vpop.f32.mrf.mxu0
  %v305 = vadd.f32 0.0, %v304
  %306 = vdwg.mxu0
  %v308 = vsel %vm87, %v305, 0
  %310 = vmatpush.xpose.msra.mxu0 0.0
  %311 = vmatpush.xpose.msra.mxu0 0.0
  %312 = vmatpush.xpose.msra.mxu0 0.0
  %313 = vmatpush.xpose.msra.mxu0 0.0
  %314 = vmatpush.xpose.msra.mxu0 0.0
  %315 = vmatpush.xpose.msra.mxu0 0.0
  %316 = vmatpush.xpose.msra.mxu0 0.0
  %317 = vmatpush.xpose.msra.mxu0 0.0
  %318 = vmatpush.xpose.msra.mxu0 0.0
  %319 = vmatpush.xpose.msra.mxu0 0.0
  %320 = vmatpush.xpose.msra.mxu0 0.0
  %321 = vmatpush.xpose.msra.mxu0 0.0
  %322 = vmatpush.xpose.msra.mxu0 %v193
  %323 = vmatpush.xpose.msra.mxu0 %v190
  %324 = vmatpush.xpose.msra.mxu0 %v187
  %325 = vmatpush.xpose.msra.mxu0 %v184
  %326 = vmatmul.f32.gmra.mxu0 %v308
  %v327 = vpop.f32.mrf.mxu0
  %v328 = vadd.f32 0.0, %v327
  %329 = vdwg.mxu0
  %v330 = vmul.f32 %v328, 0.17677669
  %v331 = vsel %vm137, %v330, -1e+30
  %v332 = vsel %vm217, %v331, -inf
  %333 = vmax.xlane.f32.xlu0 %v332
  %v334 = vpop.xlane.xlu0 %333
  %v335 = vsub.f32 %v331, %v334
  %v336 = vmul.f32 %v335, 1.442695
  %v337 = vpow.pop %v336
  %v338 = vsel %vm137, %v337, 0.0
  %v339 = vsel %vm217, %v338, 0.0
  %340 = vadd.xlane.f32.xlu0 %v339
  %v341 = vpop.xlane.xlu0 %340
  %v342 = vrcp.pop %v341
  %v343 = vmul.f32 %v338, %v342
  %v345 = vsel %vm241, %v343, 0
  %347 = vmatpush.msra.mxu0 0.0
  %348 = vmatpush.msra.mxu0 0.0
  %349 = vmatpush.msra.mxu0 0.0
  %350 = vmatpush.msra.mxu0 0.0
  %351 = vmatpush.msra.mxu0 0.0
  %352 = vmatpush.msra.mxu0 0.0
  %353 = vmatpush.msra.mxu0 0.0
  %354 = vmatpush.msra.mxu0 0.0
  %355 = vmatpush.msra.mxu0 0.0
  %356 = vmatpush.msra.mxu0 0.0
  %357 = vmatpush.msra.mxu0 0.0
  %358 = vmatpush.msra.mxu0 0.0
  %359 = vmatpush.msra.mxu0 %v246
  %360 = vmatpush.msra.mxu0 %v235
  %361 = vmatpush.msra.mxu0 %v233
  %362 = vmatpush.msra.mxu0 %v231
  %363 = vmatmul.f32.gmra.mxu0 %v345
  %v364 = vpop.f32.mrf.mxu0
  %v365 = vadd.f32 0.0, %v364
  %366 = vdwg.mxu0
  %367 = vrot.lane.b32.xlu0 %v37, 32
  %v368 = vpop.permute.xlu0 %367
  %v371 = vsel %vm87, %v365, 0
  %373 = vmatpush.msra.mxu0 0.0
  %374 = vmatpush.msra.mxu0 0.0
  %375 = vmatpush.msra.mxu0 0.0
  %376 = vmatpush.msra.mxu0 0.0
  %377 = vmatpush.msra.mxu0 0.0
  %378 = vmatpush.msra.mxu0 0.0
  %379 = vmatpush.msra.mxu0 0.0
  %380 = vmatpush.msra.mxu0 0.0
  %381 = vmatpush.msra.mxu0 0.0
  %382 = vmatpush.msra.mxu0 0.0
  %383 = vmatpush.msra.mxu0 0.0
  %384 = vmatpush.msra.mxu0 0.0
  %385 = vmatpush.msra.mxu0 %v29
  %386 = vmatpush.msra.mxu0 %v28
  %387 = vmatpush.msra.mxu0 %v27
  %388 = vmatpush.msra.mxu0 %v26
  %389 = vmatmul.f32.gmra.mxu0 %v371
  %v390 = vpop.f32.mrf.mxu0
  %v391 = vadd.f32 %v368, %v390
  %392 = vdwg.mxu0
  %vm393 = vcmask 62464
  %394 = vst.msk [vmem:[%s5] sm:$0x3f] %vm393, %v391
  %vm395 = vcmask 259072
  %396 = vst.msk [vmem:[%s6] sm:$0x3f] %vm395, %v266
  // Predicated region
  $region22: #{multi_agent_perceiver_agent.1} parent=0 // pred_check
    _
  $region23: #{multi_agent_perceiver_agent.1} parent=0 // pred_check_branch
    %398 = sbr.rel (0) target = $region25
  $region24: #{multi_agent_perceiver_agent.1} parent=0 // pred_region
    _
  $region25: #{multi_agent_perceiver_agent.1} parent=0 // pred_fallthru
    _
  // Predicated region
  $region26: #{multi_agent_perceiver_agent.1} parent=0 // pred_check
    _
  $region27: #{multi_agent_perceiver_agent.1} parent=0 // pred_check_branch
    %400 = sbr.rel (0) target = $region29
  $region28: #{multi_agent_perceiver_agent.1} parent=0 // pred_region
    _
  $region29: #{multi_agent_perceiver_agent.1} parent=0 // pred_fallthru
    _
  // Predicated region
  $region30: #{multi_agent_perceiver_agent.1} parent=0 // pred_check
    _
  $region31: #{multi_agent_perceiver_agent.1} parent=0 // pred_check_branch
    %402 = sbr.rel (0) target = $region33
  $region32: #{multi_agent_perceiver_agent.1} parent=0 // pred_region
    _
  $region33: #{multi_agent_perceiver_agent.1} parent=0 // pred_fallthru
    _
  // Predicated region
  $region34: #{multi_agent_perceiver_agent.1} parent=0 // pred_check
    _
  $region35: #{multi_agent_perceiver_agent.1} parent=0 // pred_check_branch
    %404 = sbr.rel (0) target = $region37
  $region36: #{multi_agent_perceiver_agent.1} parent=0 // pred_region
    _
  $region37: #{multi_agent_perceiver_agent.1} parent=0 // pred_fallthru
    _

</llo_original>
